<compile_context>
chip_gen: v7x
topology: tpu7x:2x2x1
jax: 0.10.0
libtpu: 0.0.40
codegen_flags: <defaults>
</compile_context>

<pallas_src>
import functools

import jax
import jax.numpy as jnp
from jax.experimental import pallas as pl
from jax.experimental.pallas import tpu as pltpu


def _shape_constraint_kernel(out_ref, tgt_ref, psu_ref, sq_ref, l1_ref,
                             sq_acc, abs_acc, *, bc, tbc, spc, need_mask):
    # out_ref, tgt_ref : (tbc, HW) native dtype (cast to f32 on load)
    # psu_ref          : (K, HW)   f32, VMEM resident across grid steps
    # sq_ref           : (1, 1, 1) f32 per-core partial sum of diff^2
    # l1_ref           : (1, K, 1) f32 per-core partial sum_hw |psu[k]|*|diff|
    # sq_acc, abs_acc  : (1, HW)   f32 scratch (per-core running column sums)
    c = pl.program_id(0)
    i = pl.program_id(1)

    @pl.when(i == 0)
    def _():
        sq_acc[...] = jnp.zeros_like(sq_acc)
        abs_acc[...] = jnp.zeros_like(abs_acc)

    diff = out_ref[...].astype(jnp.float32) - tgt_ref[...].astype(jnp.float32)
    if need_mask:
        # Zero rows of the (possibly garbage-padded / clamped) last tile that
        # fall outside the real BC extent.
        row0 = (c * spc + i) * tbc
        rows = jax.lax.broadcasted_iota(jnp.int32, (tbc, 1), 0)
        diff = jnp.where(rows < bc - row0, diff, 0.0)

    sq_acc[...] += jnp.sum(diff * diff, axis=0, keepdims=True)
    abs_acc[...] += jnp.sum(jnp.abs(diff), axis=0, keepdims=True)

    @pl.when(i == pl.num_programs(1) - 1)
    def _():
        sq_ref[...] = jnp.sum(sq_acc[...], axis=-1,
                              keepdims=True).reshape(sq_ref.shape)
        # |diff * psu[k]| == |diff| * |psu[k]|  ->  the per-filter L1 numerator
        # is a lane reduce of |psu[k]| weighted by the accumulated |diff| sums.
        psu_abs = jnp.abs(psu_ref[...])                               # (K, HW)
        l1 = jnp.sum(psu_abs * abs_acc[...], axis=-1, keepdims=True)  # (K, 1)
        l1_ref[...] = l1.reshape(l1_ref.shape)


def _choose_tile(bc, hw, itemsize, max_tile_rows=None):
    """Pick a row-tile size: (tbc, num_row_tiles)."""
    # VMEM budget for (2 image inputs) x (2 pipeline buffers).
    budget = 16 * 1024 * 1024
    vmem_rows = max(8, (budget // (4 * hw * itemsize)) // 8 * 8)
    cap = min(512, vmem_rows)
    if max_tile_rows is not None:
        cap = max(8, min(cap, (max_tile_rows // 8) * 8))
    if bc <= cap:
        return bc, 1            # single block; block dim == full array dim
    return cap, -(-bc // cap)   # cdiv


def shape_constraint_loss(output, target, psu, mu, gamma=1.0,
                          max_tile_rows=None):
    """output/target: (B, C, H, W); psu: (6, J, H, W); mu: (6, J) -> scalar."""
    B, C, H, W = output.shape
    K = psu.shape[0] * psu.shape[1]
    HW = H * W
    BC = B * C
    n = BC * HW

    out2 = output.reshape(BC, HW)                    # native dtype
    tgt2 = target.reshape(BC, HW)
    psu2 = psu.reshape(K, HW).astype(jnp.float32)
    mu_flat = mu.reshape(K).astype(jnp.float32)

    itemsize = jnp.dtype(out2.dtype).itemsize
    tbc, nblocks = _choose_tile(BC, HW, itemsize, max_tile_rows)
    ncores = 2 if nblocks >= 2 else 1                # v7x megacore split
    spc = pl.cdiv(nblocks, ncores)                   # row tiles per core
    need_clamp = (ncores * spc != nblocks)           # odd tile count
    need_mask = (tbc * nblocks != BC) or need_clamp

    if need_clamp:
        def row_map(c, i):
            return (jnp.minimum(c * spc + i, nblocks - 1), 0)
    else:
        def row_map(c, i):
            return (c * spc + i, 0)

    kernel = functools.partial(_shape_constraint_kernel,
                               bc=BC, tbc=tbc, spc=spc, need_mask=need_mask)

    sq_parts, l1_parts = pl.pallas_call(
        kernel,
        out_shape=(jax.ShapeDtypeStruct((ncores, 1, 1), jnp.float32),
                   jax.ShapeDtypeStruct((ncores, K, 1), jnp.float32)),
        grid_spec=pltpu.PrefetchScalarGridSpec(
            num_scalar_prefetch=0,
            grid=(ncores, spc),
            in_specs=[
                pl.BlockSpec((tbc, HW), row_map),             # output rows
                pl.BlockSpec((tbc, HW), row_map),             # target rows
                pl.BlockSpec((K, HW), lambda c, i: (0, 0)),   # psu, resident
            ],
            out_specs=[
                pl.BlockSpec((1, 1, 1), lambda c, i: (c, 0, 0)),
                pl.BlockSpec((1, K, 1), lambda c, i: (c, 0, 0)),
            ],
            scratch_shapes=[pltpu.VMEM((1, HW), jnp.float32),
                            pltpu.VMEM((1, HW), jnp.float32)]),
        compiler_params=pltpu.CompilerParams(
            dimension_semantics=("parallel", "arbitrary"),
            vmem_limit_bytes=32 * 1024 * 1024),
        cost_estimate=pl.CostEstimate(
            flops=5 * BC * HW + ncores * 2 * K * HW,
            transcendentals=0,
            bytes_accessed=2 * BC * HW * itemsize + K * HW * 4),
    )(out2, tgt2, psu2)

    # Tiny O(K) epilogue: the L1 means must be combined across cores *before*
    # squaring, so this cannot live inside the per-core kernel.
    inv_n = 1.0 / float(n)
    mse = jnp.sum(sq_parts) * inv_n
    l1 = jnp.sum(l1_parts[:, :, 0], axis=0) * inv_n          # (K,)
    return mse + 0.5 * float(gamma) * jnp.sum(mu_flat * l1 * l1)


def reference_loss(output, target, psu, mu, gamma=1.0):
    """Plain-JAX transcription of the PyTorch forward, for verification."""
    loss = jnp.mean((output - target) ** 2)
    for i in range(6):
        for j in range(psu.shape[1]):
            l1 = jnp.mean(jnp.abs(output * psu[i, j] - target * psu[i, j]))
            loss = loss + gamma * mu[i, j] * l1 ** 2 / 2.0
    return loss


if __name__ == "__main__":
    # TODO(synk): the real shearlet/U-moment filters (cl.makeUi, cl.get_shearlets,
    # cl.comp_mu) come from an external library; psu / mu are synthesized
    # deterministically with the correct shapes.
    key = jax.random.PRNGKey(0)
    k1, k2, k3, k4 = jax.random.split(key, 4)

    B, C, H, W = 2, 1, 16, 16   # small fov_pixels=16 demo (module uses 48)
    J = 3                       # number of shearlet bands (synthetic)

    output = jax.random.normal(k1, (B, C, H, W), jnp.float32)
    target = jax.random.normal(k2, (B, C, H, W), jnp.float32)
    psu = jax.random.normal(k3, (6, J, H, W), jnp.float32)
    mu = jnp.abs(jax.random.normal(k4, (6, J), jnp.float32))

    # 1) Default single-block path.
    loss = shape_constraint_loss(output, target, psu, mu, gamma=1.0)
    jax.block_until_ready(loss)
    ref = reference_loss(output, target, psu, mu, gamma=1.0)
    assert jnp.allclose(loss, ref, rtol=1e-4, atol=1e-5), (loss, ref)

    # 2) Multi-tile paths: (10 rows, 8-row tiles) exercises the masked partial
    #    last tile + 2-core partial combine; (24 rows, 8-row tiles) exercises
    #    an odd tile count (clamped, fully-masked extra tile on core 1).
    for bc_rows, tile_cap in ((10, 8), (24, 8)):
        o2 = jax.random.normal(k1, (bc_rows, 1, H, W), jnp.float32)
        t2 = jax.random.normal(k2, (bc_rows, 1, H, W), jnp.float32)
        l2 = shape_constraint_loss(o2, t2, psu, mu, gamma=0.5,
                                   max_tile_rows=tile_cap)
        jax.block_until_ready(l2)
        r2 = reference_loss(o2, t2, psu, mu, gamma=0.5)
        assert jnp.allclose(l2, r2, rtol=1e-4, atol=1e-5), (bc_rows, l2, r2)

    print("KERNEL_OK")
</pallas_src>

<mosaic_0001>
module attributes {stable_mosaic.version = 11 : i64} {
  func.func @_shape_constraint_kernel(%arg0: i32, %arg1: i32, %arg2: memref<2x256xf32, #tpu.memory_space<vmem>>, %arg3: memref<2x256xf32, #tpu.memory_space<vmem>>, %arg4: memref<18x256xf32, #tpu.memory_space<vmem>>, %arg5: memref<1x1x1xf32, #tpu.memory_space<vmem>>, %arg6: memref<1x18x1xf32, #tpu.memory_space<vmem>>, %arg7: memref<1x256xf32, #tpu.memory_space<vmem>>, %arg8: memref<1x256xf32, #tpu.memory_space<vmem>>) attributes {dimension_semantics = [#tpu.dimension_semantics<parallel>, #tpu.dimension_semantics<arbitrary>], iteration_bounds = array<i64: 1, 1>, scalar_prefetch = 0 : i64, scratch_operands = 2 : i64, tpu.core_type = #tpu.core_type<tc>, window_params = [{transform_indices = @transform_0, window_bounds = array<i64: 2, 256>}, {transform_indices = @transform_1, window_bounds = array<i64: 2, 256>}, {pipeline_mode = #tpu.pipeline_mode<synchronous>, transform_indices = @transform_2, window_bounds = array<i64: 18, 256>}, {transform_indices = @transform_3, window_bounds = array<i64: 1, 1, 1>}, {transform_indices = @transform_4, window_bounds = array<i64: 1, 18, 1>}]} {
    %c0_i32 = arith.constant 0 : i32
    %0 = arith.cmpi eq, %arg1, %c0_i32 : i32
    %1 = arith.extui %0 : i1 to i32
    %c0_i32_0 = arith.constant 0 : i32
    %2 = arith.cmpi ne, %1, %c0_i32_0 : i32
    scf.if %2 {
      %cst_15 = arith.constant 0.000000e+00 : f32
      %21 = vector.broadcast %cst_15 : f32 to vector<1x256xf32>
      %c0_16 = arith.constant 0 : index
      %c0_17 = arith.constant 0 : index
      %22 = vector.load %arg7[%c0_16, %c0_17] : memref<1x256xf32, #tpu.memory_space<vmem>>, vector<1x256xf32>
      tpu.vector_store %arg7[%c0_16, %c0_17], %21 {strides = array<i32>} : memref<1x256xf32, #tpu.memory_space<vmem>>, vector<1x256xf32>,
      %cst_18 = arith.constant 0.000000e+00 : f32
      %23 = vector.broadcast %cst_18 : f32 to vector<1x256xf32>
      %c0_19 = arith.constant 0 : index
      %c0_20 = arith.constant 0 : index
      %24 = vector.load %arg8[%c0_19, %c0_20] : memref<1x256xf32, #tpu.memory_space<vmem>>, vector<1x256xf32>
      tpu.vector_store %arg8[%c0_19, %c0_20], %23 {strides = array<i32>} : memref<1x256xf32, #tpu.memory_space<vmem>>, vector<1x256xf32>,
    } else {
    }
    %c0 = arith.constant 0 : index
    %c0_1 = arith.constant 0 : index
    %3 = vector.load %arg2[%c0, %c0_1] : memref<2x256xf32, #tpu.memory_space<vmem>>, vector<2x256xf32>
    %c0_2 = arith.constant 0 : index
    %c0_3 = arith.constant 0 : index
    %4 = vector.load %arg3[%c0_2, %c0_3] : memref<2x256xf32, #tpu.memory_space<vmem>>, vector<2x256xf32>
    %5 = arith.subf %3, %4 : vector<2x256xf32>
    %c0_4 = arith.constant 0 : index
    %c0_5 = arith.constant 0 : index
    %6 = vector.load %arg7[%c0_4, %c0_5] : memref<1x256xf32, #tpu.memory_space<vmem>>, vector<1x256xf32>
    %7 = arith.mulf %5, %5 : vector<2x256xf32>
    %cst = arith.constant dense<0.000000e+00> : vector<256xf32>
    %8 = vector.multi_reduction <add>, %7, %cst [0] : vector<2x256xf32> to vector<256xf32>
    %9 = vector.shape_cast %8 : vector<256xf32> to vector<1x256xf32>
    %10 = arith.addf %6, %9 : vector<1x256xf32>
    %c0_6 = arith.constant 0 : index
    %c0_7 = arith.constant 0 : index
    %11 = vector.load %arg7[%c0_6, %c0_7] : memref<1x256xf32, #tpu.memory_space<vmem>>, vector<1x256xf32>
    tpu.vector_store %arg7[%c0_6, %c0_7], %10 {strides = array<i32>} : memref<1x256xf32, #tpu.memory_space<vmem>>, vector<1x256xf32>,
    %c0_8 = arith.constant 0 : index
    %c0_9 = arith.constant 0 : index
    %12 = vector.load %arg8[%c0_8, %c0_9] : memref<1x256xf32, #tpu.memory_space<vmem>>, vector<1x256xf32>
    %13 = math.absf %5 : vector<2x256xf32>
    %cst_10 = arith.constant dense<0.000000e+00> : vector<256xf32>
    %14 = vector.multi_reduction <add>, %13, %cst_10 [0] : vector<2x256xf32> to vector<256xf32>
    %15 = vector.shape_cast %14 : vector<256xf32> to vector<1x256xf32>
    %16 = arith.addf %12, %15 : vector<1x256xf32>
    %c0_11 = arith.constant 0 : index
    %c0_12 = arith.constant 0 : index
    %17 = vector.load %arg8[%c0_11, %c0_12] : memref<1x256xf32, #tpu.memory_space<vmem>>, vector<1x256xf32>
    tpu.vector_store %arg8[%c0_11, %c0_12], %16 {strides = array<i32>} : memref<1x256xf32, #tpu.memory_space<vmem>>, vector<1x256xf32>,
    %c0_i32_13 = arith.constant 0 : i32
    %18 = arith.cmpi eq, %arg1, %c0_i32_13 : i32
    %19 = arith.extui %18 : i1 to i32
    %c0_i32_14 = arith.constant 0 : i32
    %20 = arith.cmpi ne, %19, %c0_i32_14 : i32
    scf.if %20 {
      %c0_15 = arith.constant 0 : index
      %c0_16 = arith.constant 0 : index
      %21 = vector.load %arg7[%c0_15, %c0_16] : memref<1x256xf32, #tpu.memory_space<vmem>>, vector<1x256xf32>
      %cst_17 = arith.constant dense<0.000000e+00> : vector<1xf32>
      %22 = vector.multi_reduction <add>, %21, %cst_17 [1] : vector<1x256xf32> to vector<1xf32>
      %23 = vector.shape_cast %22 : vector<1xf32> to vector<1x1xf32>
      %24 = vector.shape_cast %23 : vector<1x1xf32> to vector<1x1x1xf32>
      %c0_18 = arith.constant 0 : index
      %c0_19 = arith.constant 0 : index
      %c0_20 = arith.constant 0 : index
      %25 = vector.load %arg5[%c0_18, %c0_19, %c0_20] : memref<1x1x1xf32, #tpu.memory_space<vmem>>, vector<1x1x1xf32>
      tpu.vector_store %arg5[%c0_18, %c0_19, %c0_20], %24 {strides = array<i32>} : memref<1x1x1xf32, #tpu.memory_space<vmem>>, vector<1x1x1xf32>,
      %c0_21 = arith.constant 0 : index
      %c0_22 = arith.constant 0 : index
      %26 = vector.load %arg4[%c0_21, %c0_22] : memref<18x256xf32, #tpu.memory_space<vmem>>, vector<18x256xf32>
      %27 = math.absf %26 : vector<18x256xf32>
      %c0_23 = arith.constant 0 : index
      %c0_24 = arith.constant 0 : index
      %28 = vector.load %arg8[%c0_23, %c0_24] : memref<1x256xf32, #tpu.memory_space<vmem>>, vector<1x256xf32>
      %29 = vector.broadcast %28 : vector<1x256xf32> to vector<18x256xf32>
      %30 = arith.mulf %27, %29 : vector<18x256xf32>
      %cst_25 = arith.constant dense<0.000000e+00> : vector<18xf32>
      %31 = vector.multi_reduction <add>, %30, %cst_25 [1] : vector<18x256xf32> to vector<18xf32>
      %32 = vector.shape_cast %31 : vector<18xf32> to vector<18x1xf32>
      %33 = vector.shape_cast %32 : vector<18x1xf32> to vector<1x18x1xf32>
      %c0_26 = arith.constant 0 : index
      %c0_27 = arith.constant 0 : index
      %c0_28 = arith.constant 0 : index
      %34 = vector.load %arg6[%c0_26, %c0_27, %c0_28] : memref<1x18x1xf32, #tpu.memory_space<vmem>>, vector<1x18x1xf32>
      tpu.vector_store %arg6[%c0_26, %c0_27, %c0_28], %33 {strides = array<i32>} : memref<1x18x1xf32, #tpu.memory_space<vmem>>, vector<1x18x1xf32>,
    } else {
    }
    return
  }
  func.func @transform_0(%arg0: i32, %arg1: i32) -> (i32, i32) {
    %c1_i32 = arith.constant 1 : i32
    %0 = arith.muli %arg0, %c1_i32 : i32
    %1 = arith.addi %0, %arg1 : i32
    %c0_i32 = arith.constant 0 : i32
    %c0_i32_0 = arith.constant 0 : i32
    return %1, %c0_i32 : i32, i32
  }
  func.func @transform_1(%arg0: i32, %arg1: i32) -> (i32, i32) {
    %c1_i32 = arith.constant 1 : i32
    %0 = arith.muli %arg0, %c1_i32 : i32
    %1 = arith.addi %0, %arg1 : i32
    %c0_i32 = arith.constant 0 : i32
    %c0_i32_0 = arith.constant 0 : i32
    return %1, %c0_i32 : i32, i32
  }
  func.func @transform_2(%arg0: i32, %arg1: i32) -> (i32, i32) {
    %c0_i32 = arith.constant 0 : i32
    %c0_i32_0 = arith.constant 0 : i32
    %c0_i32_1 = arith.constant 0 : i32
    return %c0_i32, %c0_i32_0 : i32, i32
  }
  func.func @transform_3(%arg0: i32, %arg1: i32) -> (i32, i32, i32) {
    %c0_i32 = arith.constant 0 : i32
    %c0_i32_0 = arith.constant 0 : i32
    %c0_i32_1 = arith.constant 0 : i32
    return %arg0, %c0_i32, %c0_i32_0 : i32, i32, i32
  }
  func.func @transform_4(%arg0: i32, %arg1: i32) -> (i32, i32, i32) {
    %c0_i32 = arith.constant 0 : i32
    %c0_i32_0 = arith.constant 0 : i32
    %c0_i32_1 = arith.constant 0 : i32
    return %arg0, %c0_i32, %c0_i32_0 : i32, i32, i32
  }
}

</mosaic_0001>

<llo_original>
// kernel: tpu_custom_call.1
$region0: #{tpu_custom_call.1}
  #allocation0 [shape = 'u32[]', space=smem, size = 0x4, offset = 0x4, fixed_abs, tag = 'smem constant byte address 0x4 - core index']
  #allocation1 [shape = 'u32[144,128]{1,0:T(1,128)}', space=vmem, size = 0x12000, scoped, tag = 'internal scratch']
  #allocation2 [shape = 'f32[1,256]{1,0:T(1,128)}', space=vmem, size = 0x400, scoped, tag = 'scratch operand']
  #allocation3 [shape = 'f32[1,256]{1,0:T(1,128)}', space=vmem, size = 0x400, scoped, tag = 'scratch operand']
  %s0 = inlined_call_operand.hbm [shape: f32[2,256], index: 0, kind: input, shape index: {}]
  %s1 = inlined_call_operand.hbm [shape: f32[2,256], index: 1, kind: input, shape index: {}]
  %s2 = inlined_call_operand.hbm [shape: f32[18,256], index: 2, kind: input, shape index: {}]
  %s3 = inlined_call_operand.hbm [shape: f32[1,1,1], index: 3, kind: output, shape index: {0}]
  %s4 = inlined_call_operand.vmem [shape: f32[1,18,1], index: 4, kind: output, shape index: {1}]
  %5 = xla_tuple %s3, %s4
  %s6 = sld [smem:[#allocation0]]
  $region50: #{tpu_custom_call.1} parent=0
    _
  %s8 = ssub.s32 1, %s6
  %s9 = scalar_select 0, %s8, %s6
  $region1: #{tpu_custom_call.1} parent=0
    #allocation4 [shape = 'u8[2048]{0}', space=vmem, size = 0x800, scoped, tag = 'input window, operand 0, single buffered']
    #allocation5 [shape = 's32[1]{0}', space=sflag, size = 0x4, scoped, tag = 'scoped memory for tpu_custom_call.1']
    #allocation6 [shape = 's32[1]{0}', space=sflag, size = 0x4, scoped, tag = 'scoped memory for tpu_custom_call.1']
    #allocation7 [shape = 'u8[2048]{0}', space=vmem, size = 0x800, scoped, tag = 'input window, operand 1, single buffered']
    #allocation8 [shape = 's32[1]{0}', space=sflag, size = 0x4, scoped, tag = 'scoped memory for tpu_custom_call.1']
    #allocation9 [shape = 'u8[24576]{0}', space=vmem, size = 0x6000, scoped, tag = 'input window, operand 2, single buffered']
    #allocation10 [shape = 'u8[512]{0}', space=vmem, size = 0x400, scoped, tag = 'output window, operand 0, single buffered']
    %10 = vsyncpa [#allocation5], 0
    %11 = vsyncpa [#allocation8], 0
    %12 = vsyncpa [#allocation6], 0
    // Predicated region
    $region2: #{tpu_custom_call.1} parent=1 // pred_check
      _
    $region3: #{tpu_custom_call.1} parent=1 // pred_check_branch
      %14 = sbr.rel (0) target = $region5
    $region4: #{tpu_custom_call.1} parent=1 // pred_region
      %s15 = sadd.s32 0, 0
      %s17 = ssub.s32 64, 64
      %18 = vsyncadd [#allocation5], %s17
      %s19 = smul.addr %s15, 2
      %s20 = smul.addr %s19, 32
      %s21 = scalar_lea.hbm %s0, %s20
      %s23 = sshll.u32 [#allocation4], 4
      %s24 = int_to_ptr.vmem [resolvable:$true] %s23
      %26 = dma.hbm_to_vmem [thread:$0]  %s21, 64, %s24, [#allocation5]
    $region5: #{tpu_custom_call.1} parent=1 // pred_fallthru
      _
    // Predicated region
    $region6: #{tpu_custom_call.1} parent=1 // pred_check
      _
    $region7: #{tpu_custom_call.1} parent=1 // pred_check_branch
      %28 = sbr.rel (0) target = $region9
    $region8: #{tpu_custom_call.1} parent=1 // pred_region
      %s29 = sadd.s32 0, 0
      %s31 = ssub.s32 64, 64
      %32 = vsyncadd [#allocation8], %s31
      %s33 = smul.addr %s29, 2
      %s34 = smul.addr %s33, 32
      %s35 = scalar_lea.hbm %s1, %s34
      %s37 = sshll.u32 [#allocation7], 4
      %s38 = int_to_ptr.vmem [resolvable:$true] %s37
      %40 = dma.hbm_to_vmem [thread:$0]  %s35, 64, %s38, [#allocation8]
    $region9: #{tpu_custom_call.1} parent=1 // pred_fallthru
      _
    // Predicated region
    $region10: #{tpu_custom_call.1} parent=1 // pred_check
      _
    $region11: #{tpu_custom_call.1} parent=1 // pred_check_branch
      %42 = sbr.rel (0) target = $region13
    $region12: #{tpu_custom_call.1} parent=1 // pred_region
      %s44 = ssub.s32 768, 768
      %45 = vsyncadd [#allocation8], %s44
      %s46 = sshll.u32 [#allocation9], 4
      %s47 = int_to_ptr.vmem [resolvable:$true] %s46
      %52 = dma.hbm_to_vmem [thread:$0]  %s2, 768, %s47, [#allocation8], 256, 256, 16
    $region13: #{tpu_custom_call.1} parent=1 // pred_fallthru
      _
    // Predicated region
    $region14: #{tpu_custom_call.1} parent=1 // pred_check
      _
    $region15: #{tpu_custom_call.1} parent=1 // pred_check_branch
      %54 = sbr.rel (0) target = $region17
    $region16: #{tpu_custom_call.1} parent=1 // pred_region
      %55 = dma.done [#allocation5], 64
    $region17: #{tpu_custom_call.1} parent=1 // pred_fallthru
      _
    // Predicated region
    $region18: #{tpu_custom_call.1} parent=1 // pred_check
      _
    $region19: #{tpu_custom_call.1} parent=1 // pred_check_branch
      %57 = sbr.rel (0) target = $region21
    $region20: #{tpu_custom_call.1} parent=1 // pred_region
      %58 = dma.done [#allocation8], 64
    $region21: #{tpu_custom_call.1} parent=1 // pred_fallthru
      _
    // Predicated region
    $region22: #{tpu_custom_call.1} parent=1 // pred_check
      _
    $region23: #{tpu_custom_call.1} parent=1 // pred_check_branch
      %60 = sbr.rel (0) target = $region25
    $region24: #{tpu_custom_call.1} parent=1 // pred_region
      %61 = dma.done [#allocation8], 768
    $region25: #{tpu_custom_call.1} parent=1 // pred_fallthru
      _
    %s62 = sadd.s32 0, 0
    %s63 = sadd.s32 0, 0
    %p64 = scmp.eq.s32.totalorder 0, 0
    // Predicated region
    $region26: #{tpu_custom_call.1} parent=1 // pred_check
      %p65 = pneg %p64
    $region27: #{tpu_custom_call.1} parent=1 // pred_check_branch
      %67 = sbr.rel (%p65) target = $region29
    $region28: #{tpu_custom_call.1} parent=1 // pred_region
      %v68 = vlaneseq
      %vm69 = vcmp.ge.s32.totalorder %v68, 0
      %vm70 = vcmp.lt.s32.totalorder %v68, 256
      %vm71 = vmand %vm69, %vm70
      %72 = vst.msk [vmem:[#allocation2] sm:$0x3] %vm71, 0.0
      %73 = vst.msk [vmem:[#allocation3] sm:$0x3] %vm71, 0.0
    $region29: #{tpu_custom_call.1} parent=1 // pred_fallthru
      _
    %v74 = vld [vmem:[#allocation4] sm:$0xf]
    %v75 = vld [vmem:[#allocation7] sm:$0xf]
    %v76 = vsub.f32 %v74, %v75
    %v77 = vld [vmem:[#allocation2] sm:$0x3]
    %v78 = vmul.f32 %v76, %v76
    %v81 = vunpack.c.l.s4 1983009808
    %v82 = vunpack.c.0.s8 %v81
    %v83 = vlaneseq
    %v84 = vshrl.u32 %v83, 7
    %v85 = vsub.s32 %v82, %v84
    %v86 = vrot.slane %v78, %v85
    %v87 = vcombine.high %v86, %v86
    %vm90 = vcmask 1041408
    %v91 = vsel %vm90, %v86, 0.0
    %v92 = vrot.slane %v91, 4
    %v93 = vadd.f32 %v91, %v92
    %v94 = vrot.slane %v93, 2
    %v95 = vadd.f32 %v93, %v94
    %v96 = vrot.slane %v95, 1
    %v97 = vadd.f32 %v95, %v96
    %v98 = vsel %vm90, %v87, 0.0
    %v99 = vrot.slane %v98, 4
    %v100 = vadd.f32 %v98, %v99
    %v101 = vrot.slane %v100, 2
    %v102 = vadd.f32 %v100, %v101
    %v103 = vrot.slane %v102, 1
    %v104 = vadd.f32 %v102, %v103
    %v107 = vcombine.low %v97, %v104
    %v109 = vunpack.c.l.s4 1966171168
    %v110 = vunpack.c.0.s8 %v109
    %v111 = vlaneseq
    %v112 = vshrl.u32 %v111, 7
    %v113 = vsub.s32 %v110, %v112
    %v114 = vrot.slane %v107, %v113
    %v116 = vunpack.c.l.s4 1966171168
    %v117 = vunpack.c.0.s8 %v116
    %v118 = vlaneseq
    %v119 = vshrl.u32 %v118, 7
    %v120 = vsub.s32 %v117, %v119
    %v121 = vrot.slane %v114, %v120
    %v123 = vadd.f32 %v77, %v121
    %v124 = vlaneseq
    %vm125 = vcmp.ge.s32.totalorder %v124, 0
    %vm126 = vcmp.lt.s32.totalorder %v124, 256
    %vm127 = vmand %vm125, %vm126
    %128 = vst.msk [vmem:[#allocation2] sm:$0x3] %vm127, %v123
    %v129 = vld [vmem:[#allocation3] sm:$0x3]
    %v130 = vand.u32 2147483647, %v76
    %v133 = vunpack.c.l.s4 1983009808
    %v134 = vunpack.c.0.s8 %v133
    %v135 = vlaneseq
    %v136 = vshrl.u32 %v135, 7
    %v137 = vsub.s32 %v134, %v136
    %v138 = vrot.slane %v130, %v137
    %v139 = vcombine.high %v138, %v138
    %v142 = vsel %vm90, %v138, 0.0
    %v143 = vrot.slane %v142, 4
    %v144 = vadd.f32 %v142, %v143
    %v145 = vrot.slane %v144, 2
    %v146 = vadd.f32 %v144, %v145
    %v147 = vrot.slane %v146, 1
    %v148 = vadd.f32 %v146, %v147
    %v149 = vsel %vm90, %v139, 0.0
    %v150 = vrot.slane %v149, 4
    %v151 = vadd.f32 %v149, %v150
    %v152 = vrot.slane %v151, 2
    %v153 = vadd.f32 %v151, %v152
    %v154 = vrot.slane %v153, 1
    %v155 = vadd.f32 %v153, %v154
    %v158 = vcombine.low %v148, %v155
    %v160 = vunpack.c.l.s4 1966171168
    %v161 = vunpack.c.0.s8 %v160
    %v162 = vlaneseq
    %v163 = vshrl.u32 %v162, 7
    %v164 = vsub.s32 %v161, %v163
    %v165 = vrot.slane %v158, %v164
    %v167 = vunpack.c.l.s4 1966171168
    %v168 = vunpack.c.0.s8 %v167
    %v169 = vlaneseq
    %v170 = vshrl.u32 %v169, 7
    %v171 = vsub.s32 %v168, %v170
    %v172 = vrot.slane %v165, %v171
    %v174 = vadd.f32 %v129, %v172
    %175 = vst.msk [vmem:[#allocation3] sm:$0x3] %vm127, %v174
    // Predicated region
    $region30: #{tpu_custom_call.1} parent=1 // pred_check
      %p176 = pneg %p64
    $region31: #{tpu_custom_call.1} parent=1 // pred_check_branch
      %178 = sbr.rel (%p176) target = $region33
    $region32: #{tpu_custom_call.1} parent=1 // pred_region
      %v179 = vld [vmem:[#allocation2] sm:$0x3]
      %v181 = vlaneseq
      %v182 = vshrl.u32 %v181, 7
      %v183 = vsub.s32 0, %v182
      %v184 = vrot.slane %v179, %v183
      %v185 = vlaneseq
      %v186 = vshrl.u32 %v185, 7
      %v187 = vsub.s32 1, %v186
      %v188 = vrot.slane %v179, %v187
      %vm191 = vcmask 1040384
      %v192 = vsel %vm191, %v184, 0.0
      %v193 = vsel %vm191, %v188, 0.0
      %v194 = vadd.f32 %v192, %v193
      %195 = vadd.xlane.f32.xlu0 %v194
      %v196 = vpop.xlane.xlu0 %195
      %vm197 = vcmask 0
      %198 = vst.msk [vmem:[#allocation10] sm:$0x1] %vm197, %v196
      %v199 = vld [vmem:[#allocation9] sm:$0xff]
      %v200 = vld [vmem:[#allocation9 + $0x8] sm:$0xff]
      %v201 = vld [vmem:[#allocation9 + $0x10] sm:$0xff]
      %v202 = vld [vmem:[#allocation9 + $0x18] sm:$0xff]
      %v203 = vld [vmem:[#allocation9 + $0x20] sm:$0x3]
      %v204 = vld [vmem:[#allocation9 + $0x28] sm:$0x3]
      %v205 = vand.u32 2147483647, %v199
      %v206 = vand.u32 2147483647, %v200
      %v207 = vand.u32 2147483647, %v201
      %v208 = vand.u32 2147483647, %v202
      %v209 = vand.u32 2147483647, %v203
      %v210 = vand.u32 2147483647, %v204
      %v211 = vld [vmem:[#allocation3] sm:$0x3]
      %v213 = vlaneseq
      %v214 = vshrl.u32 %v213, 7
      %v215 = vsub.s32 0, %v214
      %v216 = vrot.slane %v211, %v215
      %v217 = vlaneseq
      %v218 = vshrl.u32 %v217, 7
      %v219 = vsub.s32 1, %v218
      %v220 = vrot.slane %v211, %v219
      %v223 = vmul.f32 %v205, %v216
      %v224 = vmul.f32 %v206, %v220
      %v225 = vmul.f32 %v207, %v216
      %v226 = vmul.f32 %v208, %v220
      %v227 = vmul.f32 %v209, %v216
      %v228 = vmul.f32 %v210, %v220
      %v229 = vadd.f32 %v223, %v224
      %230 = vadd.xlane.f32.xlu0 %v229
      %v231 = vpop.xlane.xlu0 %230
      %v232 = vadd.f32 %v225, %v226
      %233 = vadd.xlane.f32.xlu0 %v232
      %v234 = vpop.xlane.xlu0 %233
      %v235 = vsel %vm90, %v227, 0.0
      %v236 = vsel %vm90, %v228, 0.0
      %v237 = vadd.f32 %v235, %v236
      %238 = vadd.xlane.f32.xlu0 %v237
      %v239 = vpop.xlane.xlu0 %238
      %vm240 = vcmask 7168
      %241 = vst.msk [vmem:[%s4] sm:$0xff] %vm240, %v231
      %242 = vst.msk [vmem:[%s4 + $0x8] sm:$0xff] %vm240, %v234
      %vm243 = vcmask 1024
      %244 = vst.msk [vmem:[%s4 + $0x10] sm:$0x3] %vm243, %v239
    $region33: #{tpu_custom_call.1} parent=1 // pred_fallthru
      _
    // Predicated region
    $region34: #{tpu_custom_call.1} parent=1 // pred_check
      _
    $region35: #{tpu_custom_call.1} parent=1 // pred_check_branch
      %246 = sbr.rel (0) target = $region37
    $region36: #{tpu_custom_call.1} parent=1 // pred_region
      %s248 = ssub.s32 16, 16
      %249 = vsyncadd [#allocation6], %s248
      %s251 = sshll.u32 [#allocation10], 4
      %s252 = int_to_ptr.vmem [resolvable:$true] %s251
      %254 = dma.vmem_to_hbm [thread:$0]  %s252, 16, %s3, [#allocation6]
    $region37: #{tpu_custom_call.1} parent=1 // pred_fallthru
      _
    // Predicated region
    $region38: #{tpu_custom_call.1} parent=1 // pred_check
      _
    $region39: #{tpu_custom_call.1} parent=1 // pred_check_branch
      %256 = sbr.rel (0) target = $region41
    $region40: #{tpu_custom_call.1} parent=1 // pred_region
      _
    $region41: #{tpu_custom_call.1} parent=1 // pred_fallthru
      _
    // Predicated region
    $region42: #{tpu_custom_call.1} parent=1 // pred_check
      _
    $region43: #{tpu_custom_call.1} parent=1 // pred_check_branch
      %258 = sbr.rel (0) target = $region45
    $region44: #{tpu_custom_call.1} parent=1 // pred_region
      %259 = dma.done [#allocation6], 16
    $region45: #{tpu_custom_call.1} parent=1 // pred_fallthru
      _
    // Predicated region
    $region46: #{tpu_custom_call.1} parent=1 // pred_check
      _
    $region47: #{tpu_custom_call.1} parent=1 // pred_check_branch
      %261 = sbr.rel (0) target = $region49
    $region48: #{tpu_custom_call.1} parent=1 // pred_region
      _
    $region49: #{tpu_custom_call.1} parent=1 // pred_fallthru
      _
    %262 = vsyncpa [#allocation5], 1
    %263 = vsyncpa [#allocation8], 1
    %264 = vsyncpa [#allocation6], 1

</llo_original>
